<compile_context>
chip_gen: v5e
topology: v5e:2x2
jax: 0.10.0
libtpu: 0.0.40
codegen_flags: <defaults>
</compile_context>

<pallas_src>
import math

import jax
import jax.numpy as jnp
from jax.experimental import pallas as pl
from jax.experimental.pallas import tpu as pltpu

_LANES = 128                       # TPU lane width (last dim of a vreg)
_ROW_BYTES_CAP = 16 * 1024         # cap one slab row at 16 KiB (4096 f32 lanes)
_MIN_GRID_STEPS = 4                # aim for a few grid steps (pipeline + 2 TCs)
_DEFAULT_VMEM_CAP = 64 * 1024 * 1024   # conservative fallback (v7x per-TC VMEM)
_MAX_BLOCK_BYTES_CAP = 16 * 1024 * 1024


def _sublane_tile(itemsize: int) -> int:
    # dtype-native sublane packing: f32 -> 8, bf16/f16 -> 16, int8/fp8 -> 32.
    return {4: 8, 2: 16, 1: 32}.get(itemsize, 8)


def _vmem_budget():
    """Return (vmem_limit_bytes, per-operand block byte budget), per chip gen."""
    try:
        cap = int(getattr(pltpu.get_tpu_info(), "vmem_capacity_bytes",
                          _DEFAULT_VMEM_CAP))
    except Exception:
        cap = _DEFAULT_VMEM_CAP
    vmem_limit = (cap * 3) // 4                  # 96 MiB on 128 MiB parts, 48 MiB on v7x
    block_bytes = min(vmem_limit // 8,           # 3 operands x 2 buffers + headroom
                      _MAX_BLOCK_BYTES_CAP)
    return vmem_limit, block_bytes


def _mult_kernel(a_ref, b_ref, o_ref):
    # Elementwise product of the current VMEM tiles (VPU only; HBM-bound).
    o_ref[...] = a_ref[...] * b_ref[...]


def pallas_mult(a: jax.Array, b: jax.Array, *,
                max_block_bytes: int | None = None,
                min_pallas_bytes: int = 1 << 20) -> jax.Array:
    """Elementwise multiply of two same-shaped arrays via a Pallas TPU kernel."""
    assert a.shape == b.shape, "Mult inputs must have identical shapes"

    orig_shape = a.shape
    out_dtype = jnp.result_type(a.dtype, b.dtype)   # match PyTorch `*` promotion
    a = a.astype(out_dtype)
    b = b.astype(out_dtype)

    n = math.prod(orig_shape) if orig_shape else 1
    itemsize = jnp.dtype(out_dtype).itemsize

    # Degenerate / small inputs: dispatch + layout plumbing would dominate,
    # let XLA emit the fused multiply (covers the real (2, 256) state shapes).
    if n == 0 or n * itemsize < min_pallas_bytes:
        return a * b

    vmem_limit, default_block_bytes = _vmem_budget()
    if max_block_bytes is None:
        max_block_bytes = default_block_bytes

    sub = _sublane_tile(itemsize)

    # ---- 1) Lane width C: largest byte-capped multiple of 128 that divides n
    #      so the (rows, C) reshape needs no padding at all.
    lanes_cap = max(_LANES, (_ROW_BYTES_CAP // itemsize) // _LANES * _LANES)
    if n < _LANES:
        C = n                                       # tiny forced case: one full block
    else:
        c_max = min(lanes_cap, (n // _LANES) * _LANES)
        C = 0
        for cand in range(c_max, 0, -_LANES):
            if n % cand == 0:
                C = cand
                break
        if C == 0:
            C = c_max                               # no aligned divisor: tiny tail pad

    rows = pl.cdiv(n, C)
    n_slab = rows * C
    padded = n_slab != n

    a_flat = jnp.ravel(a)
    b_flat = jnp.ravel(b)
    if padded:
        # Minimal tail pad (< C elements, < 16 KiB) — negligible HBM traffic;
        # allow_input_fusion below lets XLA fold it into the input pipeline.
        a_flat = jnp.pad(a_flat, (0, n_slab - n))
        b_flat = jnp.pad(b_flat, (0, n_slab - n))
    a2 = a_flat.reshape(rows, C)
    b2 = b_flat.reshape(rows, C)

    # ---- 2) Block height: multiple of the dtype sublane tile, within the
    #      per-operand VMEM budget, capped so the grid has a few steps.
    if rows <= sub:
        block_rows = rows                           # block == full array dims (legal)
    else:
        rows_budget = max(1, max_block_bytes // (C * itemsize))
        block_rows = min(rows_budget, pl.cdiv(rows, _MIN_GRID_STEPS))
        block_rows = max(sub, (block_rows // sub) * sub)
        block_rows = min(block_rows, rows)

    # Partial last row-block is handled by Pallas (OOB reads padded, writes
    # masked) — no pre-padding of the row axis.
    num_blocks = pl.cdiv(rows, block_rows)

    spec = pl.BlockSpec((block_rows, C), lambda i: (i, 0))

    compiler_params = pltpu.CompilerParams(
        # TODO(synk): if a v7x profile shows only one TensorCore active,
        # switch this axis to pltpu.CORE_PARALLEL.
        dimension_semantics=("parallel",),
        vmem_limit_bytes=int(vmem_limit),
        allow_input_fusion=[True, True] if padded else None,
    )

    out2 = pl.pallas_call(
        _mult_kernel,
        out_shape=jax.ShapeDtypeStruct((rows, C), out_dtype),
        grid=(num_blocks,),
        in_specs=[spec, spec],
        out_specs=spec,
        compiler_params=compiler_params,
    )(a2, b2)

    out_flat = out2.reshape(-1)
    if padded:
        out_flat = out_flat[:n]
    return out_flat.reshape(orig_shape)


class MultPallas:
    """JAX/Pallas analogue of the PyTorch `Mult` Function module."""

    def __init__(self, **kwargs):
        self.func_name = kwargs["func_name"]
        self.inputs = kwargs["inputs"]
        self.outputs = kwargs["outputs"]
        self.state_spec = kwargs["state_spec"]
        self.input_specs = {t: self.state_spec[t] for t in self.inputs}
        self.output_specs = {t: self.state_spec[t] for t in self.outputs}
        assert len(self.inputs) == 2
        assert len(self.outputs) == 1
        in1size = self.input_specs[self.inputs[0]]
        in2size = self.input_specs[self.inputs[1]]
        outsize = self.output_specs[self.outputs[0]]
        assert in1size == in2size and in2size == outsize

    def forward(self, state_dict):
        a = state_dict[self.inputs[0]]
        b = state_dict[self.inputs[1]]
        state_dict[self.outputs[0]] = pallas_mult(a, b)
        return state_dict


if __name__ == "__main__":
    key = jax.random.PRNGKey(0)
    k1, k2, k3, k4, k5, k6, k7, k8 = jax.random.split(key, 8)

    # --- Case 1: module/state_dict path at the real homeokinesis scale
    #     (batch=2, size=256 -> 2 KiB: takes the fused-XLA small-input bypass).
    batch, size = 2, 256
    x = jax.random.normal(k1, (batch, size), dtype=jnp.float32)
    y = jax.random.normal(k2, (batch, size), dtype=jnp.float32)
    mult = MultPallas(
        func_name="mult",
        inputs=["x", "y"],
        outputs=["z"],
        state_spec={"x": size, "y": size, "z": size},
    )
    state = mult.forward({"x": x, "y": y})
    z = jax.block_until_ready(state["z"])
    assert jnp.allclose(z, x * y, atol=1e-6), "mismatch vs reference (case 1)"

    # --- Case 2: force the Pallas kernel on the same small aligned shape
    #     (single full-array block, rows < sublane tile, no padding).
    z2 = jax.block_until_ready(pallas_mult(x, y, min_pallas_bytes=0))
    assert jnp.allclose(z2, x * y, atol=1e-6), "mismatch vs reference (case 2)"

    # --- Case 3: aligned f32 input with a small block budget -> multi-block
    #     grid with a partial last row-block (Pallas-masked writeback).
    u = jax.random.normal(k3, (288, 1024), dtype=jnp.float32)
    v = jax.random.normal(k4, (288, 1024), dtype=jnp.float32)
    w = jax.block_until_ready(
        pallas_mult(u, v, min_pallas_bytes=0, max_block_bytes=256 * 1024))
    assert jnp.allclose(w, u * v, atol=1e-6), "mismatch vs reference (case 3)"

    # --- Case 4: unaligned shape forced through Pallas -> minimal tail pad
    #     plus allow_input_fusion path.
    p = jax.random.normal(k5, (10, 300), dtype=jnp.float32)
    q = jax.random.normal(k6, (10, 300), dtype=jnp.float32)
    r = jax.block_until_ready(pallas_mult(p, q, min_pallas_bytes=0))
    assert jnp.allclose(r, p * q, atol=1e-6), "mismatch vs reference (case 4)"

    # --- Case 5: bf16 state tensors (16-row sublane tile) through the kernel.
    s = jax.random.normal(k7, (288, 1024), dtype=jnp.bfloat16)
    t = jax.random.normal(k8, (288, 1024), dtype=jnp.bfloat16)
    st = jax.block_until_ready(pallas_mult(s, t, min_pallas_bytes=0))
    assert jnp.allclose(st.astype(jnp.float32), (s * t).astype(jnp.float32),
                        rtol=1e-2, atol=1e-2), "mismatch vs reference (case 5)"

    print("KERNEL_OK")
</pallas_src>

<mosaic_0001>
module attributes {stable_mosaic.version = 11 : i64} {
  func.func @_mult_kernel(%arg0: i32, %arg1: memref<1x512xf32, #tpu.memory_space<vmem>>, %arg2: memref<1x512xf32, #tpu.memory_space<vmem>>, %arg3: memref<1x512xf32, #tpu.memory_space<vmem>>) attributes {dimension_semantics = [#tpu.dimension_semantics<parallel>], iteration_bounds = array<i64: 1>, scalar_prefetch = 0 : i64, scratch_operands = 0 : i64, tpu.core_type = #tpu.core_type<tc>, window_params = [{transform_indices = @transform_0, window_bounds = array<i64: 1, 512>}, {transform_indices = @transform_1, window_bounds = array<i64: 1, 512>}, {transform_indices = @transform_2, window_bounds = array<i64: 1, 512>}]} {
    %c0 = arith.constant 0 : index
    %c0_0 = arith.constant 0 : index
    %0 = vector.load %arg1[%c0, %c0_0] : memref<1x512xf32, #tpu.memory_space<vmem>>, vector<1x512xf32>
    %c0_1 = arith.constant 0 : index
    %c0_2 = arith.constant 0 : index
    %1 = vector.load %arg2[%c0_1, %c0_2] : memref<1x512xf32, #tpu.memory_space<vmem>>, vector<1x512xf32>
    %2 = arith.mulf %0, %1 : vector<1x512xf32>
    %c0_3 = arith.constant 0 : index
    %c0_4 = arith.constant 0 : index
    %3 = vector.load %arg3[%c0_3, %c0_4] : memref<1x512xf32, #tpu.memory_space<vmem>>, vector<1x512xf32>
    tpu.vector_store %arg3[%c0_3, %c0_4], %2 {strides = array<i32>} : memref<1x512xf32, #tpu.memory_space<vmem>>, vector<1x512xf32>,
    return
  }
  func.func @transform_0(%arg0: i32) -> (i32, i32) {
    %c0_i32 = arith.constant 0 : i32
    %c0_i32_0 = arith.constant 0 : i32
    return %arg0, %c0_i32 : i32, i32
  }
  func.func @transform_1(%arg0: i32) -> (i32, i32) {
    %c0_i32 = arith.constant 0 : i32
    %c0_i32_0 = arith.constant 0 : i32
    return %arg0, %c0_i32 : i32, i32
  }
  func.func @transform_2(%arg0: i32) -> (i32, i32) {
    %c0_i32 = arith.constant 0 : i32
    %c0_i32_0 = arith.constant 0 : i32
    return %arg0, %c0_i32 : i32, i32
  }
}

</mosaic_0001>

<llo_original>
// kernel: tpu_custom_call.1
$region0: #{tpu_custom_call.1}
  #allocation0 [shape = 'u32[]', space=smem, size = 0x4, offset = 0x4, fixed_abs, tag = 'smem constant byte address 0x4 - core index']
  #allocation1 [shape = 'u32[72,128]{1,0:T(1,128)}', space=vmem, size = 0x9000, scoped, tag = 'internal scratch']
  %s0 = inlined_call_operand.hbm [shape: f32[1,512], index: 0, kind: input, shape index: {}]
  %s1 = inlined_call_operand.hbm [shape: f32[1,512], index: 1, kind: input, shape index: {}]
  %s2 = inlined_call_operand.hbm [shape: f32[1,512], index: 2, kind: output, shape index: {}]
  %s3 = sld [smem:[#allocation0]]
  $region26: #{tpu_custom_call.1} parent=0
    _
  %s5 = ssub.s32 1, %s3
  %s6 = scalar_select 0, %s5, %s3
  $region1: #{tpu_custom_call.1} parent=0
    #allocation2 [shape = 'u8[2048]{0}', space=vmem, size = 0x800, scoped, tag = 'input window, operand 0, single buffered']
    #allocation3 [shape = 's32[1]{0}', space=sflag, size = 0x4, scoped, tag = 'scoped memory for tpu_custom_call.1']
    #allocation4 [shape = 's32[1]{0}', space=sflag, size = 0x4, scoped, tag = 'scoped memory for tpu_custom_call.1']
    #allocation5 [shape = 'u8[2048]{0}', space=vmem, size = 0x800, scoped, tag = 'input window, operand 1, single buffered']
    #allocation6 [shape = 's32[1]{0}', space=sflag, size = 0x4, scoped, tag = 'scoped memory for tpu_custom_call.1']
    #allocation7 [shape = 'u8[2048]{0}', space=vmem, size = 0x800, scoped, tag = 'output window, operand 0, single buffered']
    %7 = vsyncpa [#allocation3], 0
    %8 = vsyncpa [#allocation6], 0
    %9 = vsyncpa [#allocation4], 0
    // Predicated region
    $region2: #{tpu_custom_call.1} parent=1 // pred_check
      _
    $region3: #{tpu_custom_call.1} parent=1 // pred_check_branch
      %11 = sbr.rel (0) target = $region5
    $region4: #{tpu_custom_call.1} parent=1 // pred_region
      %13 = vsyncadd [#allocation3], 0
      %s15 = sshll.u32 %s0, 4
      %s16 = int_to_ptr.hbm [resolvable:$true] %s15
      %s17 = sshll.u32 [#allocation2], 4
      %s18 = int_to_ptr.vmem [resolvable:$true] %s17
      %20 = dma.hbm_to_vmem [thread:$0]  %s16, 64, %s18, [#allocation3]
    $region5: #{tpu_custom_call.1} parent=1 // pred_fallthru
      _
    // Predicated region
    $region6: #{tpu_custom_call.1} parent=1 // pred_check
      _
    $region7: #{tpu_custom_call.1} parent=1 // pred_check_branch
      %22 = sbr.rel (0) target = $region9
    $region8: #{tpu_custom_call.1} parent=1 // pred_region
      %24 = vsyncadd [#allocation6], 0
      %s26 = sshll.u32 %s1, 4
      %s27 = int_to_ptr.hbm [resolvable:$true] %s26
      %s28 = sshll.u32 [#allocation5], 4
      %s29 = int_to_ptr.vmem [resolvable:$true] %s28
      %31 = dma.hbm_to_vmem [thread:$0]  %s27, 64, %s29, [#allocation6]
    $region9: #{tpu_custom_call.1} parent=1 // pred_fallthru
      _
    // Predicated region
    $region10: #{tpu_custom_call.1} parent=1 // pred_check
      _
    $region11: #{tpu_custom_call.1} parent=1 // pred_check_branch
      %33 = sbr.rel (0) target = $region13
    $region12: #{tpu_custom_call.1} parent=1 // pred_region
      %35 = dma.done [#allocation3], 64
    $region13: #{tpu_custom_call.1} parent=1 // pred_fallthru
      _
    // Predicated region
    $region14: #{tpu_custom_call.1} parent=1 // pred_check
      _
    $region15: #{tpu_custom_call.1} parent=1 // pred_check_branch
      %37 = sbr.rel (0) target = $region17
    $region16: #{tpu_custom_call.1} parent=1 // pred_region
      %39 = dma.done [#allocation6], 64
    $region17: #{tpu_custom_call.1} parent=1 // pred_fallthru
      _
    %v40 = vld [vmem:[#allocation2] sm:$0xf]
    %v41 = vld [vmem:[#allocation5] sm:$0xf]
    %v42 = vmul.f32 %v40, %v41
    %v43 = vlaneseq
    %vm44 = vcmp.ge.s32.totalorder %v43, 0
    %vm45 = vcmp.lt.s32.totalorder %v43, 512
    %vm46 = vmand %vm44, %vm45
    %47 = vst.msk [vmem:[#allocation7] sm:$0xf] %vm46, %v42
    // Predicated region
    $region18: #{tpu_custom_call.1} parent=1 // pred_check
      _
    $region19: #{tpu_custom_call.1} parent=1 // pred_check_branch
      %49 = sbr.rel (0) target = $region21
    $region20: #{tpu_custom_call.1} parent=1 // pred_region
      %51 = vsyncadd [#allocation4], 0
      %s53 = sshll.u32 [#allocation7], 4
      %s54 = int_to_ptr.vmem [resolvable:$true] %s53
      %s55 = sshll.u32 %s2, 4
      %s56 = int_to_ptr.hbm [resolvable:$true] %s55
      %58 = dma.vmem_to_hbm [thread:$0]  %s54, 64, %s56, [#allocation4]
    $region21: #{tpu_custom_call.1} parent=1 // pred_fallthru
      _
    // Predicated region
    $region22: #{tpu_custom_call.1} parent=1 // pred_check
      _
    $region23: #{tpu_custom_call.1} parent=1 // pred_check_branch
      %60 = sbr.rel (0) target = $region25
    $region24: #{tpu_custom_call.1} parent=1 // pred_region
      %62 = dma.done [#allocation4], 64
    $region25: #{tpu_custom_call.1} parent=1 // pred_fallthru
      _
    %63 = vsyncpa [#allocation3], 1
    %64 = vsyncpa [#allocation6], 1
    %65 = vsyncpa [#allocation4], 1

</llo_original>
